<compile_context>
chip_gen: v6e
topology: v6e:2x2x1
jax: 0.10.0
libtpu: 0.0.40
codegen_flags: <defaults>
</compile_context>

<pallas_src>
import functools

import jax
import jax.numpy as jnp
from jax.experimental import pallas as pl
from jax.experimental.pallas import tpu as pltpu

_NEG_INF = -1e30   # padded-class bias -> exp() underflows to exactly 0 in f32
_BM_CAP = 1024     # keeps the double-buffered f32 x tile ~7 MiB (fits every gen)


def _round_up(x, m):
    return (x + m - 1) // m * m


def mlp_kernel(x_ref, w1_ref, b1_ref, w2_ref, b2_ref, w3_ref, b3_ref, o_ref):
    # Layer 1 (MXU, bf16 inputs / f32 accumulation): (bm, 784) @ (784, 128).
    # x arrives f32 straight from HBM; cast to bf16 here (VPU, hidden under DMA).
    x = x_ref[...].astype(jnp.bfloat16)
    h1 = jnp.dot(x, w1_ref[...], preferred_element_type=jnp.float32)
    h1 = jnp.maximum(h1 + b1_ref[...], 0.0)           # bias + ReLU in f32

    # Layer 2: (bm, 128) @ (128, 128)   (H2 zero-padded 20 -> 128)
    h2 = jnp.dot(h1.astype(jnp.bfloat16), w2_ref[...],
                 preferred_element_type=jnp.float32)
    h2 = jnp.maximum(h2 + b2_ref[...], 0.0)

    # Layer 3 (bf16 MXU path, f32 accumulation): (bm, 128) @ (128, 128)
    # (C zero-padded 10 -> 128; padded lanes get logit = -1e30 from b3).
    logits = jnp.dot(h2.astype(jnp.bfloat16), w3_ref[...],
                     preferred_element_type=jnp.float32)
    logits = logits + b3_ref[...]

    # Numerically-stable softmax over the (padded) class axis. Padded lanes
    # contribute exp(-huge) == 0.  NOTE: deliberately -1e30, not -inf, so the
    # max-subtraction cannot produce NaN.
    m = jnp.max(logits, axis=-1, keepdims=True)
    e = jnp.exp(logits - m)
    denom = jnp.sum(e, axis=-1, keepdims=True)         # >= 1, safe for approx rcp
    o_ref[...] = (e * pl.reciprocal(denom, approx=True)).astype(o_ref.dtype)


def _resident_spec(block_shape):
    """BlockSpec for an operand whose block is identical at every grid step."""
    index_map = lambda i: (0, 0)
    try:
        # Constant index_map => a single buffer suffices; frees a bit of VMEM
        # and removes per-step buffer bookkeeping.
        return pl.BlockSpec(block_shape, index_map, pipeline_mode=pl.Buffered(1))
    except TypeError:  # older jax without pipeline_mode on BlockSpec
        return pl.BlockSpec(block_shape, index_map)


def _pick_block_b(B):
    """Generation-aware batch tile: >=2 blocks per TensorCore on multi-TC
    chips (v7x), a single big block on single-TC v5e/v6e."""
    try:
        kind = jax.devices()[0].device_kind.lower()
        multi_tc = ("v7" in kind) or ("7x" in kind)
    except Exception:  # pragma: no cover - defensive
        multi_tc = False
    target_blocks = 4 if multi_tc else 1
    return max(16, pl.cdiv(B, target_blocks))


@functools.partial(jax.jit, static_argnames=("block_b",))
def mlp_forward(x_nchw, w1, b1, w2, b2, w3, b3, *, block_b=None):
    # nn.Flatten semantics: NCHW -> [B, 784] (metadata-only reshape).
    B = x_nchw.shape[0]
    x = x_nchw.reshape(B, -1)            # f32, UNPADDED: kernel reads it directly
    D_in = x.shape[1]
    H1 = w1.shape[1]
    H2 = w2.shape[1]
    C = w3.shape[1]

    # Lane-align the small feature dims to 128 (zero padding). x / D_in is NOT
    # padded: a full-extent last dim is exempt from the (8,128) rule.
    h1_pad = _round_up(H1, 128)    # 128 -> 128
    h2_pad = _round_up(H2, 128)    # 20  -> 128
    c_pad = _round_up(C, 128)      # 10  -> 128

    # Weights in bf16 (native MXU mode on all generations); biases in f32.
    # These are tiny one-time pads/casts on resident operands.
    w1_p = jnp.pad(w1, ((0, 0), (0, h1_pad - H1))).astype(jnp.bfloat16)
    b1_p = jnp.pad(b1.reshape(1, H1), ((0, 0), (0, h1_pad - H1))).astype(jnp.float32)
    w2_p = jnp.pad(w2, ((0, h1_pad - H1), (0, h2_pad - H2))).astype(jnp.bfloat16)
    b2_p = jnp.pad(b2.reshape(1, H2), ((0, 0), (0, h2_pad - H2))).astype(jnp.float32)
    w3_p = jnp.pad(w3, ((0, h2_pad - H2), (0, c_pad - C))).astype(jnp.bfloat16)
    b3_p = jnp.pad(b3.reshape(1, C), ((0, 0), (0, c_pad - C)),
                   constant_values=_NEG_INF).astype(jnp.float32)

    # --- batch tiling (multiple of 16 for the bf16 output tile) --------------
    if block_b is None:
        block_b = _pick_block_b(B)
    bm = _round_up(min(block_b, _round_up(B, 16), _BM_CAP), 16)
    grid = (pl.cdiv(B, bm),)
    # Per-step VMEM: the f32 x tile dominates; at the bm cap of 1024 the
    # double-buffered footprint is ~7 MiB -- far under every generation's
    # scoped default (16 MiB v5e, 32 MiB v6e/v7x), so no vmem_limit_bytes is
    # needed.  On v7x the real ceiling on bm is keeping >=2 blocks per TC for
    # pipelining, not VMEM.

    out_padded = pl.pallas_call(
        mlp_kernel,
        out_shape=jax.ShapeDtypeStruct((B, c_pad), jnp.bfloat16),
        grid_spec=pltpu.PrefetchScalarGridSpec(
            num_scalar_prefetch=0,
            grid=grid,
            in_specs=[
                pl.BlockSpec((bm, D_in), lambda i: (i, 0)),  # x tile (f32, unpadded)
                _resident_spec((D_in, h1_pad)),              # w1 (bf16, resident)
                _resident_spec((1, h1_pad)),                 # b1
                _resident_spec((h1_pad, h2_pad)),            # w2
                _resident_spec((1, h2_pad)),                 # b2
                _resident_spec((h2_pad, c_pad)),             # w3
                _resident_spec((1, c_pad)),                  # b3 (-1e30 pad)
            ],
            out_specs=pl.BlockSpec((bm, c_pad), lambda i: (i, 0)),  # lane-dense bf16
        ),
        compiler_params=pltpu.CompilerParams(
            dimension_semantics=("parallel",)
        ),
    )(x, w1_p, b1_p, w2_p, b2_p, w3_p, b3_p)

    # Single cheap pass: drop the padded classes and hand back f32 probabilities.
    # (If the consumer accepts bf16 / the padded 128-wide buffer, return
    # out_padded directly and skip this too.)
    return out_padded[:, :C].astype(jnp.float32)


def init_params(key):
    """Deterministic init matching PyTorch nn.Linear default:
    U(-1/sqrt(fan_in), 1/sqrt(fan_in)) for both weight and bias.
    Weights are stored as [in, out] (transposed vs. torch's [out, in])."""
    dims = [(28 * 28, 128), (128, 20), (20, 10)]
    params = []
    for (fan_in, fan_out) in dims:
        key, kw, kb = jax.random.split(key, 3)
        bound = 1.0 / jnp.sqrt(fan_in)
        w = jax.random.uniform(kw, (fan_in, fan_out), jnp.float32, -bound, bound)
        b = jax.random.uniform(kb, (1, fan_out), jnp.float32, -bound, bound)
        params += [w, b]
    return params


def reference_forward(x_nchw, w1, b1, w2, b2, w3, b3, *, match_kernel_dtypes=False):
    x = x_nchw.reshape(x_nchw.shape[0], -1)
    if match_kernel_dtypes:
        # Same bf16-input / f32-accumulate recipe as the kernel.
        h1 = jnp.dot(x.astype(jnp.bfloat16), w1.astype(jnp.bfloat16),
                     preferred_element_type=jnp.float32)
        h1 = jnp.maximum(h1 + b1, 0.0)
        h2 = jnp.dot(h1.astype(jnp.bfloat16), w2.astype(jnp.bfloat16),
                     preferred_element_type=jnp.float32)
        h2 = jnp.maximum(h2 + b2, 0.0)
        logits = jnp.dot(h2.astype(jnp.bfloat16), w3.astype(jnp.bfloat16),
                         preferred_element_type=jnp.float32) + b3
    else:
        h1 = jnp.maximum(x @ w1 + b1, 0.0)
        h2 = jnp.maximum(h1 @ w2 + b2, 0.0)
        logits = h2 @ w3 + b3
    return jax.nn.softmax(logits, axis=1)


if __name__ == "__main__":
    key = jax.random.PRNGKey(0)
    key, kx = jax.random.split(key)

    # MNIST-like batch: NCHW [B, 1, 28, 28], kept small.
    B = 64
    x = jax.random.normal(kx, (B, 1, 28, 28), jnp.float32)

    w1, b1, w2, b2, w3, b3 = init_params(key)

    out = mlp_forward(x, w1, b1, w2, b2, w3, b3)
    out = jax.block_until_ready(out)

    ref_bf16 = reference_forward(x, w1, b1, w2, b2, w3, b3, match_kernel_dtypes=True)
    ref_f32 = reference_forward(x, w1, b1, w2, b2, w3, b3, match_kernel_dtypes=False)

    assert out.shape == (B, 10)
    # vs the dtype-matched reference (bf16 store + approx reciprocal + accum order).
    assert jnp.allclose(out, ref_bf16, atol=1e-2), float(jnp.abs(out - ref_bf16).max())
    # vs the pure-f32 PyTorch-equivalent reference.
    assert jnp.allclose(out, ref_f32, atol=2e-2), float(jnp.abs(out - ref_f32).max())
    # Softmax rows sum to ~1 (bf16 output + approx reciprocal -> loosened).
    assert jnp.allclose(jnp.sum(out, axis=1), 1.0, atol=2e-2)

    print("KERNEL_OK")
</pallas_src>

<mosaic_0001>
module attributes {stable_mosaic.version = 11 : i64} {
  func.func @mlp_kernel(%arg0: i32, %arg1: memref<64x784xf32, #tpu.memory_space<vmem>>, %arg2: memref<784x128xbf16, #tpu.memory_space<vmem>>, %arg3: memref<1x128xf32, #tpu.memory_space<vmem>>, %arg4: memref<128x128xbf16, #tpu.memory_space<vmem>>, %arg5: memref<1x128xf32, #tpu.memory_space<vmem>>, %arg6: memref<128x128xbf16, #tpu.memory_space<vmem>>, %arg7: memref<1x128xf32, #tpu.memory_space<vmem>>, %arg8: memref<64x128xbf16, #tpu.memory_space<vmem>>) attributes {dimension_semantics = [#tpu.dimension_semantics<parallel>], iteration_bounds = array<i64: 1>, scalar_prefetch = 0 : i64, scratch_operands = 0 : i64, tpu.core_type = #tpu.core_type<tc>, window_params = [{transform_indices = @transform_0, window_bounds = array<i64: 64, 784>}, {pipeline_mode = #tpu.pipeline_mode<synchronous>, transform_indices = @transform_1, window_bounds = array<i64: 784, 128>}, {pipeline_mode = #tpu.pipeline_mode<synchronous>, transform_indices = @transform_2, window_bounds = array<i64: 1, 128>}, {pipeline_mode = #tpu.pipeline_mode<synchronous>, transform_indices = @transform_3, window_bounds = array<i64: 128, 128>}, {pipeline_mode = #tpu.pipeline_mode<synchronous>, transform_indices = @transform_4, window_bounds = array<i64: 1, 128>}, {pipeline_mode = #tpu.pipeline_mode<synchronous>, transform_indices = @transform_5, window_bounds = array<i64: 128, 128>}, {pipeline_mode = #tpu.pipeline_mode<synchronous>, transform_indices = @transform_6, window_bounds = array<i64: 1, 128>}, {transform_indices = @transform_7, window_bounds = array<i64: 64, 128>}]} {
    %c0 = arith.constant 0 : index
    %c0_0 = arith.constant 0 : index
    %0 = vector.load %arg1[%c0, %c0_0] : memref<64x784xf32, #tpu.memory_space<vmem>>, vector<64x784xf32>
    %1 = arith.truncf %0 : vector<64x784xf32> to vector<64x784xbf16>
    %c0_1 = arith.constant 0 : index
    %c0_2 = arith.constant 0 : index
    %2 = vector.load %arg2[%c0_1, %c0_2] : memref<784x128xbf16, #tpu.memory_space<vmem>>, vector<784x128xbf16>
    %cst = arith.constant dense<0.000000e+00> : vector<64x128xf32>
    %3 = tpu.matmul %1, %2, %cst {dimension_numbers = #tpu.dot_dimension_numbers<[1], [0], [0], [1], [0, 0, 1, 1], [], []>} : vector<64x784xbf16>, vector<784x128xbf16>, vector<64x128xf32> -> vector<64x128xf32>
    %c0_3 = arith.constant 0 : index
    %c0_4 = arith.constant 0 : index
    %4 = vector.load %arg3[%c0_3, %c0_4] : memref<1x128xf32, #tpu.memory_space<vmem>>, vector<1x128xf32>
    %5 = vector.broadcast %4 : vector<1x128xf32> to vector<64x128xf32>
    %6 = arith.addf %3, %5 : vector<64x128xf32>
    %cst_5 = arith.constant 0.000000e+00 : f32
    %7 = vector.broadcast %cst_5 : f32 to vector<64x128xf32>
    %8 = arith.maximumf %6, %7 : vector<64x128xf32>
    %9 = arith.truncf %8 : vector<64x128xf32> to vector<64x128xbf16>
    %c0_6 = arith.constant 0 : index
    %c0_7 = arith.constant 0 : index
    %10 = vector.load %arg4[%c0_6, %c0_7] : memref<128x128xbf16, #tpu.memory_space<vmem>>, vector<128x128xbf16>
    %cst_8 = arith.constant dense<0.000000e+00> : vector<64x128xf32>
    %11 = tpu.matmul %9, %10, %cst_8 {dimension_numbers = #tpu.dot_dimension_numbers<[1], [0], [0], [1], [0, 0, 1, 1], [], []>} : vector<64x128xbf16>, vector<128x128xbf16>, vector<64x128xf32> -> vector<64x128xf32>
    %c0_9 = arith.constant 0 : index
    %c0_10 = arith.constant 0 : index
    %12 = vector.load %arg5[%c0_9, %c0_10] : memref<1x128xf32, #tpu.memory_space<vmem>>, vector<1x128xf32>
    %13 = vector.broadcast %12 : vector<1x128xf32> to vector<64x128xf32>
    %14 = arith.addf %11, %13 : vector<64x128xf32>
    %cst_11 = arith.constant 0.000000e+00 : f32
    %15 = vector.broadcast %cst_11 : f32 to vector<64x128xf32>
    %16 = arith.maximumf %14, %15 : vector<64x128xf32>
    %17 = arith.truncf %16 : vector<64x128xf32> to vector<64x128xbf16>
    %c0_12 = arith.constant 0 : index
    %c0_13 = arith.constant 0 : index
    %18 = vector.load %arg6[%c0_12, %c0_13] : memref<128x128xbf16, #tpu.memory_space<vmem>>, vector<128x128xbf16>
    %cst_14 = arith.constant dense<0.000000e+00> : vector<64x128xf32>
    %19 = tpu.matmul %17, %18, %cst_14 {dimension_numbers = #tpu.dot_dimension_numbers<[1], [0], [0], [1], [0, 0, 1, 1], [], []>} : vector<64x128xbf16>, vector<128x128xbf16>, vector<64x128xf32> -> vector<64x128xf32>
    %c0_15 = arith.constant 0 : index
    %c0_16 = arith.constant 0 : index
    %20 = vector.load %arg7[%c0_15, %c0_16] : memref<1x128xf32, #tpu.memory_space<vmem>>, vector<1x128xf32>
    %21 = vector.broadcast %20 : vector<1x128xf32> to vector<64x128xf32>
    %22 = arith.addf %19, %21 : vector<64x128xf32>
    %cst_17 = arith.constant dense<0xFF800000> : vector<64xf32>
    %23 = vector.multi_reduction <maximumf>, %22, %cst_17 [1] : vector<64x128xf32> to vector<64xf32>
    %24 = vector.shape_cast %23 : vector<64xf32> to vector<64x1xf32>
    %25 = vector.broadcast %24 : vector<64x1xf32> to vector<64x128xf32>
    %26 = arith.subf %22, %25 : vector<64x128xf32>
    %27 = math.exp %26 : vector<64x128xf32>
    %cst_18 = arith.constant dense<0.000000e+00> : vector<64xf32>
    %28 = vector.multi_reduction <add>, %27, %cst_18 [1] : vector<64x128xf32> to vector<64xf32>
    %29 = vector.shape_cast %28 : vector<64xf32> to vector<64x1xf32>
    %30 = tpu.reciprocal %29 {approx = true} : vector<64x1xf32> -> vector<64x1xf32>
    %31 = vector.broadcast %30 : vector<64x1xf32> to vector<64x128xf32>
    %32 = arith.mulf %27, %31 : vector<64x128xf32>
    %33 = arith.truncf %32 : vector<64x128xf32> to vector<64x128xbf16>
    %c0_19 = arith.constant 0 : index
    %c0_20 = arith.constant 0 : index
    %34 = vector.load %arg8[%c0_19, %c0_20] : memref<64x128xbf16, #tpu.memory_space<vmem>>, vector<64x128xbf16>
    tpu.vector_store %arg8[%c0_19, %c0_20], %33 {strides = array<i32>} : memref<64x128xbf16, #tpu.memory_space<vmem>>, vector<64x128xbf16>,
    return
  }
  func.func @transform_0(%arg0: i32) -> (i32, i32) {
    %c0_i32 = arith.constant 0 : i32
    %c0_i32_0 = arith.constant 0 : i32
    return %arg0, %c0_i32 : i32, i32
  }
  func.func @transform_1(%arg0: i32) -> (i32, i32) {
    %c0_i32 = arith.constant 0 : i32
    %c0_i32_0 = arith.constant 0 : i32
    %c0_i32_1 = arith.constant 0 : i32
    return %c0_i32, %c0_i32_0 : i32, i32
  }
  func.func @transform_2(%arg0: i32) -> (i32, i32) {
    %c0_i32 = arith.constant 0 : i32
    %c0_i32_0 = arith.constant 0 : i32
    %c0_i32_1 = arith.constant 0 : i32
    return %c0_i32, %c0_i32_0 : i32, i32
  }
  func.func @transform_3(%arg0: i32) -> (i32, i32) {
    %c0_i32 = arith.constant 0 : i32
    %c0_i32_0 = arith.constant 0 : i32
    %c0_i32_1 = arith.constant 0 : i32
    return %c0_i32, %c0_i32_0 : i32, i32
  }
  func.func @transform_4(%arg0: i32) -> (i32, i32) {
    %c0_i32 = arith.constant 0 : i32
    %c0_i32_0 = arith.constant 0 : i32
    %c0_i32_1 = arith.constant 0 : i32
    return %c0_i32, %c0_i32_0 : i32, i32
  }
  func.func @transform_5(%arg0: i32) -> (i32, i32) {
    %c0_i32 = arith.constant 0 : i32
    %c0_i32_0 = arith.constant 0 : i32
    %c0_i32_1 = arith.constant 0 : i32
    return %c0_i32, %c0_i32_0 : i32, i32
  }
  func.func @transform_6(%arg0: i32) -> (i32, i32) {
    %c0_i32 = arith.constant 0 : i32
    %c0_i32_0 = arith.constant 0 : i32
    %c0_i32_1 = arith.constant 0 : i32
    return %c0_i32, %c0_i32_0 : i32, i32
  }
  func.func @transform_7(%arg0: i32) -> (i32, i32) {
    %c0_i32 = arith.constant 0 : i32
    %c0_i32_0 = arith.constant 0 : i32
    return %arg0, %c0_i32 : i32, i32
  }
}

</mosaic_0001>

<llo_original>
// kernel: mlp_forward.1
$region0: #{mlp_forward.1}
  #allocation0 [shape = 'u32[]', space=smem, size = 0x4, offset = 0x4, fixed_abs, tag = 'smem constant byte address 0x4 - core index']
  #allocation1 [shape = 'u32[144,128]{1,0:T(1,128)}', space=vmem, size = 0x12000, scoped, tag = 'internal scratch']
  %s0 = inlined_call_operand.vmem [shape: f32[64,784], index: 0, kind: input, shape index: {}]
  %s1 = inlined_call_operand.vmem [shape: bf16[784,128], index: 1, kind: input, shape index: {}]
  %s2 = inlined_call_operand.vmem [shape: f32[1,128], index: 2, kind: input, shape index: {}]
  %s3 = inlined_call_operand.vmem [shape: bf16[128,128], index: 3, kind: input, shape index: {}]
  %s4 = inlined_call_operand.vmem [shape: f32[1,128], index: 4, kind: input, shape index: {}]
  %s5 = inlined_call_operand.vmem [shape: bf16[128,128], index: 5, kind: input, shape index: {}]
  %s6 = inlined_call_operand.vmem [shape: f32[1,128], index: 6, kind: input, shape index: {}]
  %s7 = inlined_call_operand.vmem [shape: bf16[64,128], index: 7, kind: output, shape index: {}]
  %s8 = sld [smem:[#allocation0]]
  $region38: #{mlp_forward.1} parent=0
    _
  %s10 = ssub.s32 1, %s8
  %s11 = scalar_select 0, %s10, %s8
  // Predicated region
  $region2: #{mlp_forward.1} parent=0 // pred_check
    _
  $region3: #{mlp_forward.1} parent=0 // pred_check_branch
    %13 = sbr.rel (0) target = $region5
  $region4: #{mlp_forward.1} parent=0 // pred_region
    _
  $region5: #{mlp_forward.1} parent=0 // pred_fallthru
    _
  // Predicated region
  $region6: #{mlp_forward.1} parent=0 // pred_check
    _
  $region7: #{mlp_forward.1} parent=0 // pred_check_branch
    %15 = sbr.rel (0) target = $region9
  $region8: #{mlp_forward.1} parent=0 // pred_region
    _
  $region9: #{mlp_forward.1} parent=0 // pred_fallthru
    _
  // Predicated region
  $region10: #{mlp_forward.1} parent=0 // pred_check
    _
  $region11: #{mlp_forward.1} parent=0 // pred_check_branch
    %17 = sbr.rel (0) target = $region13
  $region12: #{mlp_forward.1} parent=0 // pred_region
    _
  $region13: #{mlp_forward.1} parent=0 // pred_fallthru
    _
  // Predicated region
  $region14: #{mlp_forward.1} parent=0 // pred_check
    _
  $region15: #{mlp_forward.1} parent=0 // pred_check_branch
    %19 = sbr.rel (0) target = $region17
  $region16: #{mlp_forward.1} parent=0 // pred_region
    _
  $region17: #{mlp_forward.1} parent=0 // pred_fallthru
    _
  // Predicated region
  $region18: #{mlp_forward.1} parent=0 // pred_check
    _
  $region19: #{mlp_forward.1} parent=0 // pred_check_branch
    %21 = sbr.rel (0) target = $region21
  $region20: #{mlp_forward.1} parent=0 // pred_region
    _
  $region21: #{mlp_forward.1} parent=0 // pred_fallthru
    _
  // Predicated region
  $region22: #{mlp_forward.1} parent=0 // pred_check
    _
  $region23: #{mlp_forward.1} parent=0 // pred_check_branch
    %23 = sbr.rel (0) target = $region25
  $region24: #{mlp_forward.1} parent=0 // pred_region
    _
  $region25: #{mlp_forward.1} parent=0 // pred_fallthru
    _
  // Predicated region
  $region26: #{mlp_forward.1} parent=0 // pred_check
    _
  $region27: #{mlp_forward.1} parent=0 // pred_check_branch
    %25 = sbr.rel (0) target = $region29
  $region28: #{mlp_forward.1} parent=0 // pred_region
    _
  $region29: #{mlp_forward.1} parent=0 // pred_fallthru
    _
  %v27 = vld [vmem:[%s0] sm:$0xff]
  %v28 = vld [vmem:[%s0 + $0x8] sm:$0xff]
  %v29 = vld [vmem:[%s0 + $0x10] sm:$0xff]
  %v30 = vld [vmem:[%s0 + $0x18] sm:$0xff]
  %v31 = vld [vmem:[%s0 + $0x20] sm:$0xff]
  %v32 = vld [vmem:[%s0 + $0x28] sm:$0xff]
  %v33 = vld [vmem:[%s0 + $0x30] sm:$0xff]
  %v34 = vld [vmem:[%s0 + $0x38] sm:$0xff]
  %v35 = vld [vmem:[%s0 + $0x40] sm:$0xff]
  %v36 = vld [vmem:[%s0 + $0x48] sm:$0xff]
  %v37 = vld [vmem:[%s0 + $0x50] sm:$0xff]
  %v38 = vld [vmem:[%s0 + $0x58] sm:$0xff]
  %v39 = vld [vmem:[%s0 + $0x60] sm:$0xff]
  %v40 = vld [vmem:[%s0 + $0x68] sm:$0xff]
  %v41 = vld [vmem:[%s0 + $0x70] sm:$0xff]
  %v42 = vld [vmem:[%s0 + $0x78] sm:$0xff]
  %v43 = vld [vmem:[%s0 + $0x80] sm:$0xff]
  %v44 = vld [vmem:[%s0 + $0x88] sm:$0xff]
  %v45 = vld [vmem:[%s0 + $0x90] sm:$0xff]
  %v46 = vld [vmem:[%s0 + $0x98] sm:$0xff]
  %v47 = vld [vmem:[%s0 + $0xa0] sm:$0xff]
  %v48 = vld [vmem:[%s0 + $0xa8] sm:$0xff]
  %v49 = vld [vmem:[%s0 + $0xb0] sm:$0xff]
  %v50 = vld [vmem:[%s0 + $0xb8] sm:$0xff]
  %v51 = vld [vmem:[%s0 + $0xc0] sm:$0xff]
  %v52 = vld [vmem:[%s0 + $0xc8] sm:$0xff]
  %v53 = vld [vmem:[%s0 + $0xd0] sm:$0xff]
  %v54 = vld [vmem:[%s0 + $0xd8] sm:$0xff]
  %v55 = vld [vmem:[%s0 + $0xe0] sm:$0xff]
  %v56 = vld [vmem:[%s0 + $0xe8] sm:$0xff]
  %v57 = vld [vmem:[%s0 + $0xf0] sm:$0xff]
  %v58 = vld [vmem:[%s0 + $0xf8] sm:$0xff]
  %v59 = vld [vmem:[%s0 + $0x100] sm:$0xff]
  %v60 = vld [vmem:[%s0 + $0x108] sm:$0xff]
  %v61 = vld [vmem:[%s0 + $0x110] sm:$0xff]
  %v62 = vld [vmem:[%s0 + $0x118] sm:$0xff]
  %v63 = vld [vmem:[%s0 + $0x120] sm:$0xff]
  %v64 = vld [vmem:[%s0 + $0x128] sm:$0xff]
  %v65 = vld [vmem:[%s0 + $0x130] sm:$0xff]
  %v66 = vld [vmem:[%s0 + $0x138] sm:$0xff]
  %v67 = vld [vmem:[%s0 + $0x140] sm:$0xff]
  %v68 = vld [vmem:[%s0 + $0x148] sm:$0xff]
  %v69 = vld [vmem:[%s0 + $0x150] sm:$0xff]
  %v70 = vld [vmem:[%s0 + $0x158] sm:$0xff]
  %v71 = vld [vmem:[%s0 + $0x160] sm:$0xff]
  %v72 = vld [vmem:[%s0 + $0x168] sm:$0xff]
  %v73 = vld [vmem:[%s0 + $0x170] sm:$0xff]
  %v74 = vld [vmem:[%s0 + $0x178] sm:$0xff]
  %v75 = vld [vmem:[%s0 + $0x180] sm:$0xff]
  %v76 = vld [vmem:[%s0 + $0x188] sm:$0xff]
  %v77 = vld [vmem:[%s0 + $0x190] sm:$0xff]
  %v78 = vld [vmem:[%s0 + $0x198] sm:$0xff]
  %v79 = vld [vmem:[%s0 + $0x1a0] sm:$0xff]
  %v80 = vld [vmem:[%s0 + $0x1a8] sm:$0xff]
  %v81 = vld [vmem:[%s0 + $0x1b0] sm:$0xff]
  %v82 = vld [vmem:[%s0 + $0x1b8] sm:$0xff]
  %v83 = vpack.c.bf16 %v34, %v27
  %v84 = vpack.c.bf16 %v35, %v28
  %v85 = vpack.c.bf16 %v36, %v29
  %v86 = vpack.c.bf16 %v37, %v30
  %v87 = vpack.c.bf16 %v38, %v31
  %v88 = vpack.c.bf16 %v39, %v32
  %v89 = vpack.c.bf16 %v40, %v33
  %v90 = vpack.c.bf16 %v48, %v41
  %v91 = vpack.c.bf16 %v49, %v42
  %v92 = vpack.c.bf16 %v50, %v43
  %v93 = vpack.c.bf16 %v51, %v44
  %v94 = vpack.c.bf16 %v52, %v45
  %v95 = vpack.c.bf16 %v53, %v46
  %v96 = vpack.c.bf16 %v54, %v47
  %v97 = vpack.c.bf16 %v62, %v55
  %v98 = vpack.c.bf16 %v63, %v56
  %v99 = vpack.c.bf16 %v64, %v57
  %v100 = vpack.c.bf16 %v65, %v58
  %v101 = vpack.c.bf16 %v66, %v59
  %v102 = vpack.c.bf16 %v67, %v60
  %v103 = vpack.c.bf16 %v68, %v61
  %v104 = vpack.c.bf16 %v76, %v69
  %v105 = vpack.c.bf16 %v77, %v70
  %v106 = vpack.c.bf16 %v78, %v71
  %v107 = vpack.c.bf16 %v79, %v72
  %v108 = vpack.c.bf16 %v80, %v73
  %v109 = vpack.c.bf16 %v81, %v74
  %v110 = vpack.c.bf16 %v82, %v75
  %v111 = vld [vmem:[%s1] sm:$0xf]
  %v112 = vld [vmem:[%s1 + $0x4] sm:$0xf]
  %v113 = vld [vmem:[%s1 + $0x8] sm:$0xf]
  %v114 = vld [vmem:[%s1 + $0xc] sm:$0xf]
  %v115 = vld [vmem:[%s1 + $0x10] sm:$0xf]
  %v116 = vld [vmem:[%s1 + $0x14] sm:$0xf]
  %v117 = vld [vmem:[%s1 + $0x18] sm:$0xf]
  %v118 = vld [vmem:[%s1 + $0x1c] sm:$0xf]
  %v119 = vld [vmem:[%s1 + $0x20] sm:$0xf]
  %v120 = vld [vmem:[%s1 + $0x24] sm:$0xf]
  %v121 = vld [vmem:[%s1 + $0x28] sm:$0xf]
  %v122 = vld [vmem:[%s1 + $0x2c] sm:$0xf]
  %v123 = vld [vmem:[%s1 + $0x30] sm:$0xf]
  %v124 = vld [vmem:[%s1 + $0x34] sm:$0xf]
  %v125 = vld [vmem:[%s1 + $0x38] sm:$0xf]
  %v126 = vld [vmem:[%s1 + $0x3c] sm:$0xf]
  %v127 = vld [vmem:[%s1 + $0x40] sm:$0xf]
  %v128 = vld [vmem:[%s1 + $0x44] sm:$0xf]
  %v129 = vld [vmem:[%s1 + $0x48] sm:$0xf]
  %v130 = vld [vmem:[%s1 + $0x4c] sm:$0xf]
  %v131 = vld [vmem:[%s1 + $0x50] sm:$0xf]
  %v132 = vld [vmem:[%s1 + $0x54] sm:$0xf]
  %v133 = vld [vmem:[%s1 + $0x58] sm:$0xf]
  %v134 = vld [vmem:[%s1 + $0x5c] sm:$0xf]
  %v135 = vld [vmem:[%s1 + $0x60] sm:$0xf]
  %v136 = vld [vmem:[%s1 + $0x64] sm:$0xf]
  %v137 = vld [vmem:[%s1 + $0x68] sm:$0xf]
  %v138 = vld [vmem:[%s1 + $0x6c] sm:$0xf]
  %v139 = vld [vmem:[%s1 + $0x70] sm:$0xf]
  %v140 = vld [vmem:[%s1 + $0x74] sm:$0xf]
  %v141 = vld [vmem:[%s1 + $0x78] sm:$0xf]
  %v142 = vld [vmem:[%s1 + $0x7c] sm:$0xf]
  %v143 = vld [vmem:[%s1 + $0x80] sm:$0xf]
  %v144 = vld [vmem:[%s1 + $0x84] sm:$0xf]
  %v145 = vld [vmem:[%s1 + $0x88] sm:$0xf]
  %v146 = vld [vmem:[%s1 + $0x8c] sm:$0xf]
  %v147 = vld [vmem:[%s1 + $0x90] sm:$0xf]
  %v148 = vld [vmem:[%s1 + $0x94] sm:$0xf]
  %v149 = vld [vmem:[%s1 + $0x98] sm:$0xf]
  %v150 = vld [vmem:[%s1 + $0x9c] sm:$0xf]
  %v151 = vld [vmem:[%s1 + $0xa0] sm:$0xf]
  %v152 = vld [vmem:[%s1 + $0xa4] sm:$0xf]
  %v153 = vld [vmem:[%s1 + $0xa8] sm:$0xf]
  %v154 = vld [vmem:[%s1 + $0xac] sm:$0xf]
  %v155 = vld [vmem:[%s1 + $0xb0] sm:$0xf]
  %v156 = vld [vmem:[%s1 + $0xb4] sm:$0xf]
  %v157 = vld [vmem:[%s1 + $0xb8] sm:$0xf]
  %v158 = vld [vmem:[%s1 + $0xbc] sm:$0xf]
  %v159 = vld [vmem:[%s1 + $0xc0] sm:$0xf]
  %v160 = vld [vmem:[%s1 + $0xc4] sm:$0xf]
  %v161 = vld [vmem:[%s1 + $0xc8] sm:$0xf]
  %v162 = vld [vmem:[%s1 + $0xcc] sm:$0xf]
  %v163 = vld [vmem:[%s1 + $0xd0] sm:$0xf]
  %v164 = vld [vmem:[%s1 + $0xd4] sm:$0xf]
  %v165 = vld [vmem:[%s1 + $0xd8] sm:$0xf]
  %v166 = vld [vmem:[%s1 + $0xdc] sm:$0xf]
  %v167 = vld [vmem:[%s1 + $0xe0] sm:$0xf]
  %v168 = vld [vmem:[%s1 + $0xe4] sm:$0xf]
  %v169 = vld [vmem:[%s1 + $0xe8] sm:$0xf]
  %v170 = vld [vmem:[%s1 + $0xec] sm:$0xf]
  %v171 = vld [vmem:[%s1 + $0xf0] sm:$0xf]
  %v172 = vld [vmem:[%s1 + $0xf4] sm:$0xf]
  %v173 = vld [vmem:[%s1 + $0xf8] sm:$0xf]
  %v174 = vld [vmem:[%s1 + $0xfc] sm:$0xf]
  %v175 = vld [vmem:[%s1 + $0x100] sm:$0xf]
  %v176 = vld [vmem:[%s1 + $0x104] sm:$0xf]
  %v177 = vld [vmem:[%s1 + $0x108] sm:$0xf]
  %v178 = vld [vmem:[%s1 + $0x10c] sm:$0xf]
  %v179 = vld [vmem:[%s1 + $0x110] sm:$0xf]
  %v180 = vld [vmem:[%s1 + $0x114] sm:$0xf]
  %v181 = vld [vmem:[%s1 + $0x118] sm:$0xf]
  %v182 = vld [vmem:[%s1 + $0x11c] sm:$0xf]
  %v183 = vld [vmem:[%s1 + $0x120] sm:$0xf]
  %v184 = vld [vmem:[%s1 + $0x124] sm:$0xf]
  %v185 = vld [vmem:[%s1 + $0x128] sm:$0xf]
  %v186 = vld [vmem:[%s1 + $0x12c] sm:$0xf]
  %v187 = vld [vmem:[%s1 + $0x130] sm:$0xf]
  %v188 = vld [vmem:[%s1 + $0x134] sm:$0xf]
  %v189 = vld [vmem:[%s1 + $0x138] sm:$0xf]
  %v190 = vld [vmem:[%s1 + $0x13c] sm:$0xf]
  %v191 = vld [vmem:[%s1 + $0x140] sm:$0xf]
  %v192 = vld [vmem:[%s1 + $0x144] sm:$0xf]
  %v193 = vld [vmem:[%s1 + $0x148] sm:$0xf]
  %v194 = vld [vmem:[%s1 + $0x14c] sm:$0xf]
  %v195 = vld [vmem:[%s1 + $0x150] sm:$0xf]
  %v196 = vld [vmem:[%s1 + $0x154] sm:$0xf]
  %v197 = vld [vmem:[%s1 + $0x158] sm:$0xf]
  %v198 = vld [vmem:[%s1 + $0x15c] sm:$0xf]
  %v199 = vld [vmem:[%s1 + $0x160] sm:$0xf]
  %v200 = vld [vmem:[%s1 + $0x164] sm:$0xf]
  %v201 = vld [vmem:[%s1 + $0x168] sm:$0xf]
  %v202 = vld [vmem:[%s1 + $0x16c] sm:$0xf]
  %v203 = vld [vmem:[%s1 + $0x170] sm:$0xf]
  %v204 = vld [vmem:[%s1 + $0x174] sm:$0xf]
  %v205 = vld [vmem:[%s1 + $0x178] sm:$0xf]
  %v206 = vld [vmem:[%s1 + $0x17c] sm:$0xf]
  %v207 = vld [vmem:[%s1 + $0x180] sm:$0xf]
  %v208 = vld [vmem:[%s1 + $0x184] sm:$0xf]
  %v209 = vld [vmem:[%s2] sm:$0x1]
  %v211 = vlaneseq
  %v212 = vshrl.u32 %v211, 7
  %v213 = vsub.s32 0, %v212
  %v214 = vrot.slane %v209, %v213
  %v314 = vunpack.c.l.b16 %v111
  %v315 = vunpack.c.l.b16 %v112
  %v316 = vunpack.c.l.b16 %v113
  %v317 = vunpack.c.l.b16 %v114
  %v318 = vunpack.c.l.b16 %v115
  %v319 = vunpack.c.l.b16 %v116
  %v320 = vunpack.c.l.b16 %v117
  %v321 = vunpack.c.l.b16 %v118
  %v322 = vunpack.c.l.b16 %v119
  %v323 = vunpack.c.l.b16 %v120
  %v324 = vunpack.c.l.b16 %v121
  %v325 = vunpack.c.l.b16 %v122
  %v326 = vunpack.c.l.b16 %v123
  %v327 = vunpack.c.l.b16 %v124
  %v328 = vunpack.c.l.b16 %v125
  %v329 = vunpack.c.l.b16 %v126
  %v330 = vunpack.c.l.b16 %v127
  %v331 = vunpack.c.l.b16 %v128
  %v332 = vunpack.c.l.b16 %v129
  %v333 = vunpack.c.l.b16 %v130
  %v334 = vunpack.c.l.b16 %v131
  %v335 = vunpack.c.l.b16 %v132
  %v336 = vunpack.c.l.b16 %v133
  %v337 = vunpack.c.l.b16 %v134
  %v338 = vunpack.c.l.b16 %v135
  %v339 = vunpack.c.l.b16 %v136
  %v340 = vunpack.c.l.b16 %v137
  %v341 = vunpack.c.l.b16 %v138
  %v342 = vunpack.c.l.b16 %v139
  %v343 = vunpack.c.l.b16 %v140
  %v344 = vunpack.c.l.b16 %v141
  %v345 = vunpack.c.l.b16 %v142
  %v346 = vunpack.c.l.b16 %v143
  %v347 = vunpack.c.l.b16 %v144
  %v348 = vunpack.c.l.b16 %v145
  %v349 = vunpack.c.l.b16 %v146
  %v350 = vunpack.c.l.b16 %v147
  %v351 = vunpack.c.l.b16 %v148
  %v352 = vunpack.c.l.b16 %v149
  %v353 = vunpack.c.l.b16 %v150
  %v354 = vunpack.c.l.b16 %v151
  %v355 = vunpack.c.l.b16 %v152
  %v356 = vunpack.c.l.b16 %v153
  %v357 = vunpack.c.l.b16 %v154
  %v358 = vunpack.c.l.b16 %v155
  %v359 = vunpack.c.l.b16 %v156
  %v360 = vunpack.c.l.b16 %v157
  %v361 = vunpack.c.l.b16 %v158
  %v362 = vunpack.c.l.b16 %v159
  %v363 = vunpack.c.l.b16 %v160
  %v364 = vunpack.c.l.b16 %v161
  %v365 = vunpack.c.l.b16 %v162
  %v366 = vunpack.c.l.b16 %v163
  %v367 = vunpack.c.l.b16 %v164
  %v368 = vunpack.c.l.b16 %v165
  %v369 = vunpack.c.l.b16 %v166
  %v370 = vunpack.c.l.b16 %v167
  %v371 = vunpack.c.l.b16 %v168
  %v372 = vunpack.c.l.b16 %v169
  %v373 = vunpack.c.l.b16 %v170
  %v374 = vunpack.c.l.b16 %v171
  %v375 = vunpack.c.l.b16 %v172
  %v376 = vunpack.c.l.b16 %v173
  %v377 = vunpack.c.l.b16 %v174
  %v378 = vunpack.c.l.b16 %v175
  %v379 = vunpack.c.l.b16 %v176
  %v380 = vunpack.c.l.b16 %v177
  %v381 = vunpack.c.l.b16 %v178
  %v382 = vunpack.c.l.b16 %v179
  %v383 = vunpack.c.l.b16 %v180
  %v384 = vunpack.c.l.b16 %v181
  %v385 = vunpack.c.l.b16 %v182
  %v386 = vunpack.c.l.b16 %v183
  %v387 = vunpack.c.l.b16 %v184
  %v388 = vunpack.c.l.b16 %v185
  %v389 = vunpack.c.l.b16 %v186
  %v390 = vunpack.c.l.b16 %v187
  %v391 = vunpack.c.l.b16 %v188
  %v392 = vunpack.c.l.b16 %v189
  %v393 = vunpack.c.l.b16 %v190
  %v394 = vunpack.c.l.b16 %v191
  %v395 = vunpack.c.l.b16 %v192
  %v396 = vunpack.c.l.b16 %v193
  %v397 = vunpack.c.l.b16 %v194
  %v398 = vunpack.c.l.b16 %v195
  %v399 = vunpack.c.l.b16 %v196
  %v400 = vunpack.c.l.b16 %v197
  %v401 = vunpack.c.l.b16 %v198
  %v402 = vunpack.c.l.b16 %v199
  %v403 = vunpack.c.l.b16 %v200
  %v404 = vunpack.c.l.b16 %v201
  %v405 = vunpack.c.l.b16 %v202
  %v406 = vunpack.c.l.b16 %v203
  %v407 = vunpack.c.l.b16 %v204
  %v408 = vunpack.c.l.b16 %v205
  %v409 = vunpack.c.l.b16 %v206
  %v410 = vunpack.c.l.b16 %v207
  %v411 = vunpack.c.l.b16 %v208
  %v412 = vpack.c.b16 %v315, %v314
  %v413 = vpack.c.b16 %v317, %v316
  %v414 = vpack.c.b16 %v319, %v318
  %v415 = vpack.c.b16 %v321, %v320
  %v416 = vpack.c.b16 %v323, %v322
  %v417 = vpack.c.b16 %v325, %v324
  %v418 = vpack.c.b16 %v327, %v326
  %v419 = vpack.c.b16 %v329, %v328
  %v420 = vpack.c.b16 %v331, %v330
  %v421 = vpack.c.b16 %v333, %v332
  %v422 = vpack.c.b16 %v335, %v334
  %v423 = vpack.c.b16 %v337, %v336
  %v424 = vpack.c.b16 %v339, %v338
  %v425 = vpack.c.b16 %v341, %v340
  %v426 = vpack.c.b16 %v343, %v342
  %v427 = vpack.c.b16 %v345, %v344
  %v428 = vpack.c.b16 %v347, %v346
  %v429 = vpack.c.b16 %v349, %v348
  %v430 = vpack.c.b16 %v351, %v350
  %v431 = vpack.c.b16 %v353, %v352
  %v432 = vpack.c.b16 %v355, %v354
  %v433 = vpack.c.b16 %v357, %v356
  %v434 = vpack.c.b16 %v359, %v358
  %v435 = vpack.c.b16 %v361, %v360
  %v436 = vpack.c.b16 %v363, %v362
  %v437 = vpack.c.b16 %v365, %v364
  %v438 = vpack.c.b16 %v367, %v366
  %v439 = vpack.c.b16 %v369, %v368
  %v440 = vpack.c.b16 %v371, %v370
  %v441 = vpack.c.b16 %v373, %v372
  %v442 = vpack.c.b16 %v375, %v374
  %v443 = vpack.c.b16 %v377, %v376
  %v444 = vpack.c.b16 %v379, %v378
  %v445 = vpack.c.b16 %v381, %v380
  %v446 = vpack.c.b16 %v383, %v382
  %v447 = vpack.c.b16 %v385, %v384
  %v448 = vpack.c.b16 %v387, %v386
  %v449 = vpack.c.b16 %v389, %v388
  %v450 = vpack.c.b16 %v391, %v390
  %v451 = vpack.c.b16 %v393, %v392
  %v452 = vpack.c.b16 %v395, %v394
  %v453 = vpack.c.b16 %v397, %v396
  %v454 = vpack.c.b16 %v399, %v398
  %v455 = vpack.c.b16 %v401, %v400
  %v456 = vpack.c.b16 %v403, %v402
  %v457 = vpack.c.b16 %v405, %v404
  %v458 = vpack.c.b16 %v407, %v406
  %v459 = vpack.c.b16 %v409, %v408
  %v460 = vpack.c.b16 %v411, %v410
  %vm510 = vcmask 130048
  %v512 = vsel %vm510, %v89, 0
  %v515 = vsel %vm510, %v96, 0
  %v518 = vsel %vm510, %v103, 0
  %v521 = vsel %vm510, %v110, 0
  %523 = vmatprep.subr.bf16.mxu0 0
  %524 = vmatpush1.bf16.msra.mxu0 %v419
  %525 = vmatprep.subr.bf16.mxu0 0
  %526 = vmatpush1.bf16.msra.mxu0 %v418
  %527 = vmatprep.subr.bf16.mxu0 0
  %528 = vmatpush1.bf16.msra.mxu0 %v417
  %529 = vmatprep.subr.bf16.mxu0 0
  %530 = vmatpush1.bf16.msra.mxu0 %v416
  %531 = vmatprep.subr.bf16.mxu0 0
  %532 = vmatpush1.bf16.msra.mxu0 %v415
  %533 = vmatprep.subr.bf16.mxu0 0
  %534 = vmatpush1.bf16.msra.mxu0 %v414
  %535 = vmatprep.subr.bf16.mxu0 0
  %536 = vmatpush1.bf16.msra.mxu0 %v413
  %537 = vmatprep.subr.bf16.mxu0 0
  %538 = vmatpush1.bf16.msra.mxu0 %v412
  %539 = vmatprep.subr.bf16.mxu0 0
  %540 = vmatpush2.bf16.msra.mxu0 %v427
  %541 = vmatprep.subr.bf16.mxu0 0
  %542 = vmatpush2.bf16.msra.mxu0 %v426
  %543 = vmatprep.subr.bf16.mxu0 0
  %544 = vmatpush2.bf16.msra.mxu0 %v425
  %545 = vmatprep.subr.bf16.mxu0 0
  %546 = vmatpush2.bf16.msra.mxu0 %v424
  %547 = vmatprep.subr.bf16.mxu0 0
  %548 = vmatpush2.bf16.msra.mxu0 %v423
  %549 = vmatprep.subr.bf16.mxu0 0
  %550 = vmatpush2.bf16.msra.mxu0 %v422
  %551 = vmatprep.subr.bf16.mxu0 0
  %552 = vmatpush2.bf16.msra.mxu0 %v421
  %553 = vmatprep.subr.bf16.mxu0 0
  %554 = vmatpush2.bf16.msra.mxu0 %v420
  %555 = vmatprep.mubr.bf16.mxu0 %v84
  %556 = vmatmul.mubr.bf16.gmra.mxu0 %v83
  %v557 = vpop.f32.mrf.mxu0
  %v558 = vadd.f32 %v214, %v557
  %v559 = vpop.f32.mrf.mxu0
  %v560 = vpop.f32.mrf.mxu0
  %v561 = vadd.f32 %v214, %v560
  %v562 = vpop.f32.mrf.mxu0
  %563 = vmatprep.mubr.bf16.mxu0 %v91
  %564 = vmatmul.mubr.bf16.gmra.mxu0 %v90
  %v565 = vpop.f32.mrf.mxu0
  %v566 = vadd.f32 %v214, %v565
  %v567 = vpop.f32.mrf.mxu0
  %v568 = vpop.f32.mrf.mxu0
  %v569 = vadd.f32 %v214, %v568
  %v570 = vpop.f32.mrf.mxu0
  %571 = vmatprep.mubr.bf16.mxu0 %v98
  %572 = vmatmul.mubr.bf16.gmra.mxu0 %v97
  %v573 = vpop.f32.mrf.mxu0
  %v574 = vadd.f32 %v214, %v573
  %v575 = vpop.f32.mrf.mxu0
  %v576 = vpop.f32.mrf.mxu0
  %v577 = vadd.f32 %v214, %v576
  %v578 = vpop.f32.mrf.mxu0
  %579 = vmatprep.mubr.bf16.mxu0 %v105
  %580 = vmatmul.mubr.bf16.gmra.mxu0 %v104
  %v581 = vpop.f32.mrf.mxu0
  %v582 = vadd.f32 %v214, %v581
  %v583 = vpop.f32.mrf.mxu0
  %v584 = vpop.f32.mrf.mxu0
  %v585 = vadd.f32 %v214, %v584
  %v586 = vpop.f32.mrf.mxu0
  %587 = vdwg.mxu0
  %588 = vmatprep.subr.bf16.mxu0 0
  %589 = vmatpush1.bf16.msra.mxu0 %v435
  %590 = vmatprep.subr.bf16.mxu0 0
  %591 = vmatpush1.bf16.msra.mxu0 %v434
  %592 = vmatprep.subr.bf16.mxu0 0
  %593 = vmatpush1.bf16.msra.mxu0 %v433
  %594 = vmatprep.subr.bf16.mxu0 0
  %595 = vmatpush1.bf16.msra.mxu0 %v432
  %596 = vmatprep.subr.bf16.mxu0 0
  %597 = vmatpush1.bf16.msra.mxu0 %v431
  %598 = vmatprep.subr.bf16.mxu0 0
  %599 = vmatpush1.bf16.msra.mxu0 %v430
  %600 = vmatprep.subr.bf16.mxu0 0
  %601 = vmatpush1.bf16.msra.mxu0 %v429
  %602 = vmatprep.subr.bf16.mxu0 0
  %603 = vmatpush1.bf16.msra.mxu0 %v428
  %604 = vmatprep.subr.bf16.mxu0 0
  %605 = vmatpush2.bf16.msra.mxu0 %v443
  %606 = vmatprep.subr.bf16.mxu0 0
  %607 = vmatpush2.bf16.msra.mxu0 %v442
  %608 = vmatprep.subr.bf16.mxu0 0
  %609 = vmatpush2.bf16.msra.mxu0 %v441
  %610 = vmatprep.subr.bf16.mxu0 0
  %611 = vmatpush2.bf16.msra.mxu0 %v440
  %612 = vmatprep.subr.bf16.mxu0 0
  %613 = vmatpush2.bf16.msra.mxu0 %v439
  %614 = vmatprep.subr.bf16.mxu0 0
  %615 = vmatpush2.bf16.msra.mxu0 %v438
  %616 = vmatprep.subr.bf16.mxu0 0
  %617 = vmatpush2.bf16.msra.mxu0 %v437
  %618 = vmatprep.subr.bf16.mxu0 0
  %619 = vmatpush2.bf16.msra.mxu0 %v436
  %620 = vmatprep.mubr.bf16.mxu0 %v86
  %621 = vmatmul.mubr.bf16.gmra.mxu0 %v85
  %v622 = vpop.f32.mrf.mxu0
  %v623 = vadd.f32 %v558, %v622
  %v624 = vpop.f32.mrf.mxu0
  %v625 = vpop.f32.mrf.mxu0
  %v626 = vadd.f32 %v561, %v625
  %v627 = vpop.f32.mrf.mxu0
  %628 = vmatprep.mubr.bf16.mxu0 %v93
  %629 = vmatmul.mubr.bf16.gmra.mxu0 %v92
  %v630 = vpop.f32.mrf.mxu0
  %v631 = vadd.f32 %v566, %v630
  %v632 = vpop.f32.mrf.mxu0
  %v633 = vpop.f32.mrf.mxu0
  %v634 = vadd.f32 %v569, %v633
  %v635 = vpop.f32.mrf.mxu0
  %636 = vmatprep.mubr.bf16.mxu0 %v100
  %637 = vmatmul.mubr.bf16.gmra.mxu0 %v99
  %v638 = vpop.f32.mrf.mxu0
  %v639 = vadd.f32 %v574, %v638
  %v640 = vpop.f32.mrf.mxu0
  %v641 = vpop.f32.mrf.mxu0
  %v642 = vadd.f32 %v577, %v641
  %v643 = vpop.f32.mrf.mxu0
  %644 = vmatprep.mubr.bf16.mxu0 %v107
  %645 = vmatmul.mubr.bf16.gmra.mxu0 %v106
  %v646 = vpop.f32.mrf.mxu0
  %v647 = vadd.f32 %v582, %v646
  %v648 = vpop.f32.mrf.mxu0
  %v649 = vpop.f32.mrf.mxu0
  %v650 = vadd.f32 %v585, %v649
  %v651 = vpop.f32.mrf.mxu0
  %652 = vdwg.mxu0
  %653 = vmatprep.subr.bf16.mxu0 0
  %654 = vmatpush1.bf16.msra.mxu0 %v451
  %655 = vmatprep.subr.bf16.mxu0 0
  %656 = vmatpush1.bf16.msra.mxu0 %v450
  %657 = vmatprep.subr.bf16.mxu0 0
  %658 = vmatpush1.bf16.msra.mxu0 %v449
  %659 = vmatprep.subr.bf16.mxu0 0
  %660 = vmatpush1.bf16.msra.mxu0 %v448
  %661 = vmatprep.subr.bf16.mxu0 0
  %662 = vmatpush1.bf16.msra.mxu0 %v447
  %663 = vmatprep.subr.bf16.mxu0 0
  %664 = vmatpush1.bf16.msra.mxu0 %v446
  %665 = vmatprep.subr.bf16.mxu0 0
  %666 = vmatpush1.bf16.msra.mxu0 %v445
  %667 = vmatprep.subr.bf16.mxu0 0
  %668 = vmatpush1.bf16.msra.mxu0 %v444
  %669 = vmatprep.subr.bf16.mxu0 0
  %670 = vmatpush2.bf16.msra.mxu0 %v459
  %671 = vmatprep.subr.bf16.mxu0 0
  %672 = vmatpush2.bf16.msra.mxu0 %v458
  %673 = vmatprep.subr.bf16.mxu0 0
  %674 = vmatpush2.bf16.msra.mxu0 %v457
  %675 = vmatprep.subr.bf16.mxu0 0
  %676 = vmatpush2.bf16.msra.mxu0 %v456
  %677 = vmatprep.subr.bf16.mxu0 0
  %678 = vmatpush2.bf16.msra.mxu0 %v455
  %679 = vmatprep.subr.bf16.mxu0 0
  %680 = vmatpush2.bf16.msra.mxu0 %v454
  %681 = vmatprep.subr.bf16.mxu0 0
  %682 = vmatpush2.bf16.msra.mxu0 %v453
  %683 = vmatprep.subr.bf16.mxu0 0
  %684 = vmatpush2.bf16.msra.mxu0 %v452
  %685 = vmatprep.mubr.bf16.mxu0 %v88
  %686 = vmatmul.mubr.bf16.gmra.mxu0 %v87
  %v687 = vpop.f32.mrf.mxu0
  %v688 = vadd.f32 %v623, %v687
  %v689 = vpop.f32.mrf.mxu0
  %v690 = vpop.f32.mrf.mxu0
  %v691 = vadd.f32 %v626, %v690
  %v692 = vpop.f32.mrf.mxu0
  %693 = vmatprep.mubr.bf16.mxu0 %v95
  %694 = vmatmul.mubr.bf16.gmra.mxu0 %v94
  %v695 = vpop.f32.mrf.mxu0
  %v696 = vadd.f32 %v631, %v695
  %v697 = vpop.f32.mrf.mxu0
  %v698 = vpop.f32.mrf.mxu0
  %v699 = vadd.f32 %v634, %v698
  %v700 = vpop.f32.mrf.mxu0
  %701 = vmatprep.mubr.bf16.mxu0 %v102
  %702 = vmatmul.mubr.bf16.gmra.mxu0 %v101
  %v703 = vpop.f32.mrf.mxu0
  %v704 = vadd.f32 %v639, %v703
  %v705 = vpop.f32.mrf.mxu0
  %v706 = vpop.f32.mrf.mxu0
  %v707 = vadd.f32 %v642, %v706
  %v708 = vpop.f32.mrf.mxu0
  %709 = vmatprep.mubr.bf16.mxu0 %v109
  %710 = vmatmul.mubr.bf16.gmra.mxu0 %v108
  %v711 = vpop.f32.mrf.mxu0
  %v712 = vadd.f32 %v647, %v711
  %v713 = vpop.f32.mrf.mxu0
  %v714 = vpop.f32.mrf.mxu0
  %v715 = vadd.f32 %v650, %v714
  %v716 = vpop.f32.mrf.mxu0
  %717 = vdwg.mxu0
  %718 = vmatprep.subr.bf16.mxu0 0
  %719 = vmatpush1.bf16.msra.mxu0 0
  %720 = vmatprep.subr.bf16.mxu0 0
  %721 = vmatpush1.bf16.msra.mxu0 0
  %722 = vmatprep.subr.bf16.mxu0 0
  %723 = vmatpush1.bf16.msra.mxu0 0
  %724 = vmatprep.subr.bf16.mxu0 0
  %725 = vmatpush1.bf16.msra.mxu0 0
  %726 = vmatprep.subr.bf16.mxu0 0
  %727 = vmatpush1.bf16.msra.mxu0 0
  %728 = vmatprep.subr.bf16.mxu0 0
  %729 = vmatpush1.bf16.msra.mxu0 0
  %730 = vmatprep.subr.bf16.mxu0 0
  %731 = vmatpush1.bf16.msra.mxu0 0
  %732 = vmatprep.subr.bf16.mxu0 0
  %733 = vmatpush1.bf16.msra.mxu0 %v460
  %734 = vmatprep.subr.bf16.mxu0 0
  %735 = vmatpush2.bf16.msra.mxu0 0
  %736 = vmatprep.subr.bf16.mxu0 0
  %737 = vmatpush2.bf16.msra.mxu0 0
  %738 = vmatprep.subr.bf16.mxu0 0
  %739 = vmatpush2.bf16.msra.mxu0 0
  %740 = vmatprep.subr.bf16.mxu0 0
  %741 = vmatpush2.bf16.msra.mxu0 0
  %742 = vmatprep.subr.bf16.mxu0 0
  %743 = vmatpush2.bf16.msra.mxu0 0
  %744 = vmatprep.subr.bf16.mxu0 0
  %745 = vmatpush2.bf16.msra.mxu0 0
  %746 = vmatprep.subr.bf16.mxu0 0
  %747 = vmatpush2.bf16.msra.mxu0 0
  %748 = vmatprep.subr.bf16.mxu0 0
  %749 = vmatpush2.bf16.msra.mxu0 0
  %750 = vmatprep.mubr.bf16.mxu0 0
  %751 = vmatmul.mubr.bf16.gmra.mxu0 %v512
  %v752 = vpop.f32.mrf.mxu0
  %v753 = vadd.f32 %v688, %v752
  %v754 = vpop.f32.mrf.mxu0
  %v755 = vpop.f32.mrf.mxu0
  %v756 = vadd.f32 %v691, %v755
  %v757 = vpop.f32.mrf.mxu0
  %758 = vmatprep.mubr.bf16.mxu0 0
  %759 = vmatmul.mubr.bf16.gmra.mxu0 %v515
  %v760 = vpop.f32.mrf.mxu0
  %v761 = vadd.f32 %v696, %v760
  %v762 = vpop.f32.mrf.mxu0
  %v763 = vpop.f32.mrf.mxu0
  %v764 = vadd.f32 %v699, %v763
  %v765 = vpop.f32.mrf.mxu0
  %766 = vmatprep.mubr.bf16.mxu0 0
  %767 = vmatmul.mubr.bf16.gmra.mxu0 %v518
  %v768 = vpop.f32.mrf.mxu0
  %v769 = vadd.f32 %v704, %v768
  %v770 = vpop.f32.mrf.mxu0
  %v771 = vpop.f32.mrf.mxu0
  %v772 = vadd.f32 %v707, %v771
  %v773 = vpop.f32.mrf.mxu0
  %774 = vmatprep.mubr.bf16.mxu0 0
  %775 = vmatmul.mubr.bf16.gmra.mxu0 %v521
  %v776 = vpop.f32.mrf.mxu0
  %v777 = vadd.f32 %v712, %v776
  %v778 = vpop.f32.mrf.mxu0
  %v779 = vpop.f32.mrf.mxu0
  %v780 = vadd.f32 %v715, %v779
  %v781 = vpop.f32.mrf.mxu0
  %782 = vdwg.mxu0
  %v783 = vmax.f32 %v753, 0.0
  %v784 = vmax.f32 %v756, 0.0
  %v785 = vmax.f32 %v761, 0.0
  %v786 = vmax.f32 %v764, 0.0
  %v787 = vmax.f32 %v769, 0.0
  %v788 = vmax.f32 %v772, 0.0
  %v789 = vmax.f32 %v777, 0.0
  %v790 = vmax.f32 %v780, 0.0
  %v791 = vpack.c.bf16 %v784, %v783
  %v792 = vpack.c.bf16 %v786, %v785
  %v793 = vpack.c.bf16 %v788, %v787
  %v794 = vpack.c.bf16 %v790, %v789
  %v795 = vld [vmem:[%s3] sm:$0xf]
  %v796 = vld [vmem:[%s3 + $0x4] sm:$0xf]
  %v797 = vld [vmem:[%s3 + $0x8] sm:$0xf]
  %v798 = vld [vmem:[%s3 + $0xc] sm:$0xf]
  %v799 = vld [vmem:[%s3 + $0x10] sm:$0xf]
  %v800 = vld [vmem:[%s3 + $0x14] sm:$0xf]
  %v801 = vld [vmem:[%s3 + $0x18] sm:$0xf]
  %v802 = vld [vmem:[%s3 + $0x1c] sm:$0xf]
  %v803 = vld [vmem:[%s3 + $0x20] sm:$0xf]
  %v804 = vld [vmem:[%s3 + $0x24] sm:$0xf]
  %v805 = vld [vmem:[%s3 + $0x28] sm:$0xf]
  %v806 = vld [vmem:[%s3 + $0x2c] sm:$0xf]
  %v807 = vld [vmem:[%s3 + $0x30] sm:$0xf]
  %v808 = vld [vmem:[%s3 + $0x34] sm:$0xf]
  %v809 = vld [vmem:[%s3 + $0x38] sm:$0xf]
  %v810 = vld [vmem:[%s3 + $0x3c] sm:$0xf]
  %v811 = vld [vmem:[%s4] sm:$0x1]
  %v813 = vlaneseq
  %v814 = vshrl.u32 %v813, 7
  %v815 = vsub.s32 0, %v814
  %v816 = vrot.slane %v811, %v815
  %v834 = vunpack.c.l.b16 %v795
  %v835 = vunpack.c.l.b16 %v796
  %v836 = vunpack.c.l.b16 %v797
  %v837 = vunpack.c.l.b16 %v798
  %v838 = vunpack.c.l.b16 %v799
  %v839 = vunpack.c.l.b16 %v800
  %v840 = vunpack.c.l.b16 %v801
  %v841 = vunpack.c.l.b16 %v802
  %v842 = vunpack.c.l.b16 %v803
  %v843 = vunpack.c.l.b16 %v804
  %v844 = vunpack.c.l.b16 %v805
  %v845 = vunpack.c.l.b16 %v806
  %v846 = vunpack.c.l.b16 %v807
  %v847 = vunpack.c.l.b16 %v808
  %v848 = vunpack.c.l.b16 %v809
  %v849 = vunpack.c.l.b16 %v810
  %v850 = vpack.c.b16 %v835, %v834
  %v851 = vpack.c.b16 %v837, %v836
  %v852 = vpack.c.b16 %v839, %v838
  %v853 = vpack.c.b16 %v841, %v840
  %v854 = vpack.c.b16 %v843, %v842
  %v855 = vpack.c.b16 %v845, %v844
  %v856 = vpack.c.b16 %v847, %v846
  %v857 = vpack.c.b16 %v849, %v848
  %866 = vmatprep.subr.bf16.mxu0 0
  %867 = vmatpush1.bf16.msra.mxu0 %v857
  %868 = vmatprep.subr.bf16.mxu0 0
  %869 = vmatpush1.bf16.msra.mxu0 %v856
  %870 = vmatprep.subr.bf16.mxu0 0
  %871 = vmatpush1.bf16.msra.mxu0 %v855
  %872 = vmatprep.subr.bf16.mxu0 0
  %873 = vmatpush1.bf16.msra.mxu0 %v854
  %874 = vmatprep.subr.bf16.mxu0 0
  %875 = vmatpush1.bf16.msra.mxu0 %v853
  %876 = vmatprep.subr.bf16.mxu0 0
  %877 = vmatpush1.bf16.msra.mxu0 %v852
  %878 = vmatprep.subr.bf16.mxu0 0
  %879 = vmatpush1.bf16.msra.mxu0 %v851
  %880 = vmatprep.subr.bf16.mxu0 0
  %881 = vmatpush1.bf16.msra.mxu0 %v850
  %882 = vmatprep.subr.bf16.mxu0 0
  %883 = vmatpush2.bf16.msra.mxu0 0
  %884 = vmatprep.subr.bf16.mxu0 0
  %885 = vmatpush2.bf16.msra.mxu0 0
  %886 = vmatprep.subr.bf16.mxu0 0
  %887 = vmatpush2.bf16.msra.mxu0 0
  %888 = vmatprep.subr.bf16.mxu0 0
  %889 = vmatpush2.bf16.msra.mxu0 0
  %890 = vmatprep.subr.bf16.mxu0 0
  %891 = vmatpush2.bf16.msra.mxu0 0
  %892 = vmatprep.subr.bf16.mxu0 0
  %893 = vmatpush2.bf16.msra.mxu0 0
  %894 = vmatprep.subr.bf16.mxu0 0
  %895 = vmatpush2.bf16.msra.mxu0 0
  %896 = vmatprep.subr.bf16.mxu0 0
  %897 = vmatpush2.bf16.msra.mxu0 0
  %898 = vmatprep.mubr.bf16.mxu0 0
  %899 = vmatmul.mubr.bf16.gmra.mxu0 %v791
  %v900 = vpop.f32.mrf.mxu0
  %v901 = vadd.f32 %v816, %v900
  %v902 = vpop.f32.mrf.mxu0
  %v903 = vpop.f32.mrf.mxu0
  %v904 = vadd.f32 %v816, %v903
  %v905 = vpop.f32.mrf.mxu0
  %906 = vmatprep.mubr.bf16.mxu0 0
  %907 = vmatmul.mubr.bf16.gmra.mxu0 %v792
  %v908 = vpop.f32.mrf.mxu0
  %v909 = vadd.f32 %v816, %v908
  %v910 = vpop.f32.mrf.mxu0
  %v911 = vpop.f32.mrf.mxu0
  %v912 = vadd.f32 %v816, %v911
  %v913 = vpop.f32.mrf.mxu0
  %914 = vmatprep.mubr.bf16.mxu0 0
  %915 = vmatmul.mubr.bf16.gmra.mxu0 %v793
  %v916 = vpop.f32.mrf.mxu0
  %v917 = vadd.f32 %v816, %v916
  %v918 = vpop.f32.mrf.mxu0
  %v919 = vpop.f32.mrf.mxu0
  %v920 = vadd.f32 %v816, %v919
  %v921 = vpop.f32.mrf.mxu0
  %922 = vmatprep.mubr.bf16.mxu0 0
  %923 = vmatmul.mubr.bf16.gmra.mxu0 %v794
  %v924 = vpop.f32.mrf.mxu0
  %v925 = vadd.f32 %v816, %v924
  %v926 = vpop.f32.mrf.mxu0
  %v927 = vpop.f32.mrf.mxu0
  %v928 = vadd.f32 %v816, %v927
  %v929 = vpop.f32.mrf.mxu0
  %930 = vdwg.mxu0
  %v931 = vmax.f32 %v901, 0.0
  %v932 = vmax.f32 %v904, 0.0
  %v933 = vmax.f32 %v909, 0.0
  %v934 = vmax.f32 %v912, 0.0
  %v935 = vmax.f32 %v917, 0.0
  %v936 = vmax.f32 %v920, 0.0
  %v937 = vmax.f32 %v925, 0.0
  %v938 = vmax.f32 %v928, 0.0
  %v939 = vpack.c.bf16 %v932, %v931
  %v940 = vpack.c.bf16 %v934, %v933
  %v941 = vpack.c.bf16 %v936, %v935
  %v942 = vpack.c.bf16 %v938, %v937
  %v943 = vld [vmem:[%s5] sm:$0xf]
  %v944 = vld [vmem:[%s5 + $0x4] sm:$0xf]
  %v945 = vld [vmem:[%s5 + $0x8] sm:$0xf]
  %v946 = vld [vmem:[%s5 + $0xc] sm:$0xf]
  %v947 = vld [vmem:[%s5 + $0x10] sm:$0xf]
  %v948 = vld [vmem:[%s5 + $0x14] sm:$0xf]
  %v949 = vld [vmem:[%s5 + $0x18] sm:$0xf]
  %v950 = vld [vmem:[%s5 + $0x1c] sm:$0xf]
  %v951 = vld [vmem:[%s5 + $0x20] sm:$0xf]
  %v952 = vld [vmem:[%s5 + $0x24] sm:$0xf]
  %v953 = vld [vmem:[%s5 + $0x28] sm:$0xf]
  %v954 = vld [vmem:[%s5 + $0x2c] sm:$0xf]
  %v955 = vld [vmem:[%s5 + $0x30] sm:$0xf]
  %v956 = vld [vmem:[%s5 + $0x34] sm:$0xf]
  %v957 = vld [vmem:[%s5 + $0x38] sm:$0xf]
  %v958 = vld [vmem:[%s5 + $0x3c] sm:$0xf]
  %v959 = vld [vmem:[%s6] sm:$0x1]
  %v961 = vlaneseq
  %v962 = vshrl.u32 %v961, 7
  %v963 = vsub.s32 0, %v962
  %v964 = vrot.slane %v959, %v963
  %v982 = vunpack.c.l.b16 %v943
  %v983 = vunpack.c.l.b16 %v944
  %v984 = vunpack.c.l.b16 %v945
  %v985 = vunpack.c.l.b16 %v946
  %v986 = vunpack.c.l.b16 %v947
  %v987 = vunpack.c.l.b16 %v948
  %v988 = vunpack.c.l.b16 %v949
  %v989 = vunpack.c.l.b16 %v950
  %v990 = vunpack.c.l.b16 %v951
  %v991 = vunpack.c.l.b16 %v952
  %v992 = vunpack.c.l.b16 %v953
  %v993 = vunpack.c.l.b16 %v954
  %v994 = vunpack.c.l.b16 %v955
  %v995 = vunpack.c.l.b16 %v956
  %v996 = vunpack.c.l.b16 %v957
  %v997 = vunpack.c.l.b16 %v958
  %v998 = vpack.c.b16 %v983, %v982
  %v999 = vpack.c.b16 %v985, %v984
  %v1000 = vpack.c.b16 %v987, %v986
  %v1001 = vpack.c.b16 %v989, %v988
  %v1002 = vpack.c.b16 %v991, %v990
  %v1003 = vpack.c.b16 %v993, %v992
  %v1004 = vpack.c.b16 %v995, %v994
  %v1005 = vpack.c.b16 %v997, %v996
  %1014 = vmatprep.subr.bf16.mxu0 0
  %1015 = vmatpush1.bf16.msra.mxu0 %v1005
  %1016 = vmatprep.subr.bf16.mxu0 0
  %1017 = vmatpush1.bf16.msra.mxu0 %v1004
  %1018 = vmatprep.subr.bf16.mxu0 0
  %1019 = vmatpush1.bf16.msra.mxu0 %v1003
  %1020 = vmatprep.subr.bf16.mxu0 0
  %1021 = vmatpush1.bf16.msra.mxu0 %v1002
  %1022 = vmatprep.subr.bf16.mxu0 0
  %1023 = vmatpush1.bf16.msra.mxu0 %v1001
  %1024 = vmatprep.subr.bf16.mxu0 0
  %1025 = vmatpush1.bf16.msra.mxu0 %v1000
  %1026 = vmatprep.subr.bf16.mxu0 0
  %1027 = vmatpush1.bf16.msra.mxu0 %v999
  %1028 = vmatprep.subr.bf16.mxu0 0
  %1029 = vmatpush1.bf16.msra.mxu0 %v998
  %1030 = vmatprep.subr.bf16.mxu0 0
  %1031 = vmatpush2.bf16.msra.mxu0 0
  %1032 = vmatprep.subr.bf16.mxu0 0
  %1033 = vmatpush2.bf16.msra.mxu0 0
  %1034 = vmatprep.subr.bf16.mxu0 0
  %1035 = vmatpush2.bf16.msra.mxu0 0
  %1036 = vmatprep.subr.bf16.mxu0 0
  %1037 = vmatpush2.bf16.msra.mxu0 0
  %1038 = vmatprep.subr.bf16.mxu0 0
  %1039 = vmatpush2.bf16.msra.mxu0 0
  %1040 = vmatprep.subr.bf16.mxu0 0
  %1041 = vmatpush2.bf16.msra.mxu0 0
  %1042 = vmatprep.subr.bf16.mxu0 0
  %1043 = vmatpush2.bf16.msra.mxu0 0
  %1044 = vmatprep.subr.bf16.mxu0 0
  %1045 = vmatpush2.bf16.msra.mxu0 0
  %1046 = vmatprep.mubr.bf16.mxu0 0
  %1047 = vmatmul.mubr.bf16.gmra.mxu0 %v939
  %v1048 = vpop.f32.mrf.mxu0
  %v1049 = vadd.f32 %v964, %v1048
  %v1050 = vpop.f32.mrf.mxu0
  %v1051 = vpop.f32.mrf.mxu0
  %v1052 = vadd.f32 %v964, %v1051
  %v1053 = vpop.f32.mrf.mxu0
  %1054 = vmatprep.mubr.bf16.mxu0 0
  %1055 = vmatmul.mubr.bf16.gmra.mxu0 %v940
  %v1056 = vpop.f32.mrf.mxu0
  %v1057 = vadd.f32 %v964, %v1056
  %v1058 = vpop.f32.mrf.mxu0
  %v1059 = vpop.f32.mrf.mxu0
  %v1060 = vadd.f32 %v964, %v1059
  %v1061 = vpop.f32.mrf.mxu0
  %1062 = vmatprep.mubr.bf16.mxu0 0
  %1063 = vmatmul.mubr.bf16.gmra.mxu0 %v941
  %v1064 = vpop.f32.mrf.mxu0
  %v1065 = vadd.f32 %v964, %v1064
  %v1066 = vpop.f32.mrf.mxu0
  %v1067 = vpop.f32.mrf.mxu0
  %v1068 = vadd.f32 %v964, %v1067
  %v1069 = vpop.f32.mrf.mxu0
  %1070 = vmatprep.mubr.bf16.mxu0 0
  %1071 = vmatmul.mubr.bf16.gmra.mxu0 %v942
  %v1072 = vpop.f32.mrf.mxu0
  %v1073 = vadd.f32 %v964, %v1072
  %v1074 = vpop.f32.mrf.mxu0
  %v1075 = vpop.f32.mrf.mxu0
  %v1076 = vadd.f32 %v964, %v1075
  %v1077 = vpop.f32.mrf.mxu0
  %1078 = vdwg.mxu0
  %1079 = vmax.xlane.f32.xlu0 %v1049
  %v1080 = vpop.xlane.xlu0 %1079
  %1081 = vmax.xlane.f32.xlu0 %v1052
  %v1082 = vpop.xlane.xlu0 %1081
  %1083 = vmax.xlane.f32.xlu0 %v1057
  %v1084 = vpop.xlane.xlu0 %1083
  %1085 = vmax.xlane.f32.xlu0 %v1060
  %v1086 = vpop.xlane.xlu0 %1085
  %1087 = vmax.xlane.f32.xlu0 %v1065
  %v1088 = vpop.xlane.xlu0 %1087
  %1089 = vmax.xlane.f32.xlu0 %v1068
  %v1090 = vpop.xlane.xlu0 %1089
  %1091 = vmax.xlane.f32.xlu0 %v1073
  %v1092 = vpop.xlane.xlu0 %1091
  %1093 = vmax.xlane.f32.xlu0 %v1076
  %v1094 = vpop.xlane.xlu0 %1093
  %v1095 = vsub.f32 %v1049, %v1080
  %v1096 = vsub.f32 %v1052, %v1082
  %v1097 = vsub.f32 %v1057, %v1084
  %v1098 = vsub.f32 %v1060, %v1086
  %v1099 = vsub.f32 %v1065, %v1088
  %v1100 = vsub.f32 %v1068, %v1090
  %v1101 = vsub.f32 %v1073, %v1092
  %v1102 = vsub.f32 %v1076, %v1094
  %v1103 = vmul.f32 %v1095, 1.442695
  %v1104 = vpow.pop %v1103
  %v1105 = vmul.f32 %v1096, 1.442695
  %v1106 = vpow.pop %v1105
  %v1107 = vmul.f32 %v1097, 1.442695
  %v1108 = vpow.pop %v1107
  %v1109 = vmul.f32 %v1098, 1.442695
  %v1110 = vpow.pop %v1109
  %v1111 = vmul.f32 %v1099, 1.442695
  %v1112 = vpow.pop %v1111
  %v1113 = vmul.f32 %v1100, 1.442695
  %v1114 = vpow.pop %v1113
  %v1115 = vmul.f32 %v1101, 1.442695
  %v1116 = vpow.pop %v1115
  %v1117 = vmul.f32 %v1102, 1.442695
  %v1118 = vpow.pop %v1117
  %1119 = vadd.xlane.f32.xlu0 %v1104
  %v1120 = vpop.xlane.xlu0 %1119
  %1121 = vadd.xlane.f32.xlu0 %v1106
  %v1122 = vpop.xlane.xlu0 %1121
  %1123 = vadd.xlane.f32.xlu0 %v1108
  %v1124 = vpop.xlane.xlu0 %1123
  %1125 = vadd.xlane.f32.xlu0 %v1110
  %v1126 = vpop.xlane.xlu0 %1125
  %1127 = vadd.xlane.f32.xlu0 %v1112
  %v1128 = vpop.xlane.xlu0 %1127
  %1129 = vadd.xlane.f32.xlu0 %v1114
  %v1130 = vpop.xlane.xlu0 %1129
  %1131 = vadd.xlane.f32.xlu0 %v1116
  %v1132 = vpop.xlane.xlu0 %1131
  %1133 = vadd.xlane.f32.xlu0 %v1118
  %v1134 = vpop.xlane.xlu0 %1133
  %v1135 = vrcp.pop %v1120
  %v1136 = vrcp.pop %v1122
  %v1137 = vrcp.pop %v1124
  %v1138 = vrcp.pop %v1126
  %v1139 = vrcp.pop %v1128
  %v1140 = vrcp.pop %v1130
  %v1141 = vrcp.pop %v1132
  %v1142 = vrcp.pop %v1134
  %v1143 = vmul.f32 %v1104, %v1135
  %v1144 = vmul.f32 %v1106, %v1136
  %v1145 = vmul.f32 %v1108, %v1137
  %v1146 = vmul.f32 %v1110, %v1138
  %v1147 = vmul.f32 %v1112, %v1139
  %v1148 = vmul.f32 %v1114, %v1140
  %v1149 = vmul.f32 %v1116, %v1141
  %v1150 = vmul.f32 %v1118, %v1142
  %v1151 = vpack.c.bf16 %v1144, %v1143
  %v1152 = vpack.c.bf16 %v1146, %v1145
  %v1153 = vpack.c.bf16 %v1148, %v1147
  %v1154 = vpack.c.bf16 %v1150, %v1149
  %v1159 = vunpack.c.l.b16 %v1151
  %v1160 = vunpack.c.h.b16 %v1151
  %v1161 = vunpack.c.l.b16 %v1152
  %v1162 = vunpack.c.h.b16 %v1152
  %v1163 = vunpack.c.l.b16 %v1153
  %v1164 = vunpack.c.h.b16 %v1153
  %v1165 = vunpack.c.l.b16 %v1154
  %v1166 = vunpack.c.h.b16 %v1154
  %v1167 = vpack.c.b16 %v1159, %v1159
  %v1168 = vpack.c.b16 %v1160, %v1160
  %v1169 = vpack.c.b16 %v1161, %v1161
  %v1170 = vpack.c.b16 %v1162, %v1162
  %v1171 = vpack.c.b16 %v1163, %v1163
  %v1172 = vpack.c.b16 %v1164, %v1164
  %v1173 = vpack.c.b16 %v1165, %v1165
  %v1174 = vpack.c.b16 %v1166, %v1166
  %1183 = vst [vmem:[%s7] sm:$0xf] %v1167
  %1184 = vst [vmem:[%s7 + $0x4] sm:$0xf] %v1168
  %1185 = vst [vmem:[%s7 + $0x8] sm:$0xf] %v1169
  %1186 = vst [vmem:[%s7 + $0xc] sm:$0xf] %v1170
  %1187 = vst [vmem:[%s7 + $0x10] sm:$0xf] %v1171
  %1188 = vst [vmem:[%s7 + $0x14] sm:$0xf] %v1172
  %1189 = vst [vmem:[%s7 + $0x18] sm:$0xf] %v1173
  %1190 = vst [vmem:[%s7 + $0x1c] sm:$0xf] %v1174
  // Predicated region
  $region30: #{mlp_forward.1} parent=0 // pred_check
    _
  $region31: #{mlp_forward.1} parent=0 // pred_check_branch
    %1192 = sbr.rel (0) target = $region33
  $region32: #{mlp_forward.1} parent=0 // pred_region
    _
  $region33: #{mlp_forward.1} parent=0 // pred_fallthru
    _
  // Predicated region
  $region34: #{mlp_forward.1} parent=0 // pred_check
    _
  $region35: #{mlp_forward.1} parent=0 // pred_check_branch
    %1194 = sbr.rel (0) target = $region37
  $region36: #{mlp_forward.1} parent=0 // pred_region
    _
  $region37: #{mlp_forward.1} parent=0 // pred_fallthru
    _

</llo_original>
